<compile_context>
chip_gen: v7x
topology: tpu7x:2x2x1
jax: 0.10.0
libtpu: 0.0.40
codegen_flags: <defaults>
</compile_context>

<pallas_src>
import jax
import jax.numpy as jnp
from jax.experimental import pallas as pl
from jax.experimental.pallas import tpu as pltpu

_LANE = 128      # lane width (last dim)
_SUBLANE = 8     # f32 sublane count (second-to-last dim)
_MIB = 1 << 20


def _round_up(x, m):
    return ((x + m - 1) // m) * m


# -----------------------------------------------------------------------------
# Hardware introspection (best effort; safe defaults if unavailable).
# -----------------------------------------------------------------------------
def _tpu_generation():
    try:
        kind = jax.devices()[0].device_kind.lower()
    except Exception:
        return "unknown"
    if "v5 lite" in kind or "v5e" in kind or "v5litepod" in kind:
        return "v5e"
    if "v6" in kind:
        return "v6e"
    if "v7" in kind:
        return "v7x"
    return "unknown"


def _vmem_capacity_bytes(gen):
    try:
        cap = getattr(pltpu.get_tpu_info(), "vmem_capacity_bytes", None)
        if cap:
            return int(cap)
    except Exception:
        pass
    return (64 if gen == "v7x" else 128) * _MIB


# -----------------------------------------------------------------------------
# Tiling / VMEM budgeting helpers.
# -----------------------------------------------------------------------------
def _choose_tm(batch, dims_p, gen):
    """Per-generation, padding-aware batch tile."""
    max_dim_p = max(dims_p)
    if gen == "v5e":
        cap = 128          # 4x128^2 MXU: 128 rows already fill it; less spill
    elif gen == "v7x":
        cap = 256          # 64 MiB per-core VMEM: keep activation tiles modest
    else:                  # v6e / unknown: 128 MiB VMEM, amortize step overhead
        cap = 512 if (max_dim_p <= 256 and batch >= 512) else 256
    # Bound the live activation value (tm * max_dim_p * 4 B) to ~512 KiB.
    while cap > _SUBLANE and cap * max_dim_p * 4 > 512 * 1024:
        cap //= 2
    # Padding-aware pick: smallest padded batch wins; ties -> larger tile.
    best_tm, best_bp = None, None
    t = cap
    while t >= _SUBLANE:
        bp = _round_up(batch, t)
        if best_bp is None or bp < best_bp:
            best_tm, best_bp = t, bp
        t //= 2
    return best_tm


def _group_footprint(dims_p_seq, tm, w_itemsize, n_weight_bufs):
    """Resident VMEM bytes for one fused layer group."""
    n = len(dims_p_seq) - 1
    w_bytes = sum(
        dims_p_seq[i] * dims_p_seq[i + 1] * w_itemsize + dims_p_seq[i + 1] * 4
        for i in range(n)) * n_weight_bufs
    act_bytes = 2 * tm * dims_p_seq[0] * 4 + 2 * tm * dims_p_seq[-1] * 4
    work_bytes = 2 * tm * max(dims_p_seq) * 4          # live intermediate h
    return w_bytes + act_bytes + work_bytes + 2 * _MIB  # headroom


def _split_layer_groups(dims_p, tm, w_itemsize, budget):
    """Greedy split into layer groups whose resident footprint fits `budget`."""
    n = len(dims_p) - 1
    groups, start = [], 0
    while start < n:
        end = start + 1
        while end < n and _group_footprint(
                dims_p[start:end + 2], tm, w_itemsize, 1) <= budget:
            end += 1
        # TODO(synk): if a single layer alone exceeds `budget`, stream its
        # weight over K with an inner pltpu.emit_pipeline instead of keeping
        # it fully VMEM-resident.
        groups.append((start, end))
        start = end
    return groups


# -----------------------------------------------------------------------------
# Kernel.
# -----------------------------------------------------------------------------
def _make_fused_mlp_kernel(num_layers):
    """refs = (x, w0, b0, w1, b1, ..., w_{L-1}, b_{L-1}, out)."""

    def kernel(*refs):
        x_ref = refs[0]
        o_ref = refs[1 + 2 * num_layers]
        h = x_ref[...]                                    # (tm, Din_p) f32
        for l in range(num_layers):                       # unrolled at trace time
            w = refs[1 + 2 * l][...]                      # (Din_p, Dout_p)
            b = refs[2 + 2 * l][...]                      # (1, Dout_p) f32
            lhs = h if h.dtype == w.dtype else h.astype(w.dtype)   # bf16 MXU path
            h = jnp.dot(lhs, w, preferred_element_type=jnp.float32) + b
            h = jnp.maximum(h, 0.0)                       # ReLU (dropout p=0, no BN)
        o_ref[...] = h.astype(o_ref.dtype)

    return kernel


def _fused_group_call(x_p, layer_params, dims_seq, dims_p_seq, tm, B_p,
                      mxu_dtype, vmem_cap):
    """One pallas_call over a group of layers with all weights VMEM-resident."""
    n = len(layer_params)
    w_itemsize = jnp.dtype(mxu_dtype).itemsize

    operands = [x_p]
    for l, (w, b) in enumerate(layer_params):
        din, dout = dims_seq[l], dims_seq[l + 1]
        din_p, dout_p = dims_p_seq[l], dims_p_seq[l + 1]
        w_p = jnp.zeros((din_p, dout_p), mxu_dtype).at[:din, :dout].set(
            w.astype(mxu_dtype))
        b_p = jnp.zeros((1, dout_p), jnp.float32).at[0, :dout].set(b.reshape(-1))
        operands += [w_p, b_p]

    flops = sum(2 * B_p * dims_p_seq[l] * dims_p_seq[l + 1] for l in range(n))
    bytes_accessed = (
        4 * B_p * dims_p_seq[0] + 4 * B_p * dims_p_seq[-1]
        + sum(w_itemsize * dims_p_seq[l] * dims_p_seq[l + 1]
              + 4 * dims_p_seq[l + 1] for l in range(n)))

    def build_and_run(single_buffer_weights):
        in_specs = [pl.BlockSpec((tm, dims_p_seq[0]), lambda i: (i, 0))]
        for l in range(n):
            w_shape = (dims_p_seq[l], dims_p_seq[l + 1])
            b_shape = (1, dims_p_seq[l + 1])
            if single_buffer_weights:
                # Constant index_map -> DMA'd once; a 2nd pipeline buffer would
                # only double resident weight VMEM with nothing to overlap.
                in_specs.append(pl.BlockSpec(w_shape, lambda i: (0, 0),
                                             pipeline_mode=pl.Buffered(1)))
                in_specs.append(pl.BlockSpec(b_shape, lambda i: (0, 0),
                                             pipeline_mode=pl.Buffered(1)))
            else:
                in_specs.append(pl.BlockSpec(w_shape, lambda i: (0, 0)))
                in_specs.append(pl.BlockSpec(b_shape, lambda i: (0, 0)))
        out_specs = pl.BlockSpec((tm, dims_p_seq[-1]), lambda i: (i, 0))

        n_bufs = 1 if single_buffer_weights else 2
        needed = _group_footprint(dims_p_seq, tm, w_itemsize, n_bufs)
        vmem_limit = int(min(max(needed, 32 * _MIB), vmem_cap))

        out = pl.pallas_call(
            _make_fused_mlp_kernel(n),
            out_shape=jax.ShapeDtypeStruct((B_p, dims_p_seq[-1]), jnp.float32),
            grid_spec=pltpu.PrefetchScalarGridSpec(
                num_scalar_prefetch=0,
                grid=(B_p // tm,),
                in_specs=in_specs,
                out_specs=out_specs,
            ),
            compiler_params=pltpu.CompilerParams(
                # Batch tiles shard across TensorCores on multi-core parts.
                # TODO(synk): on v7x with a 1-step batch grid, also split the
                # widest layer's output dim across cores for megacore use.
                dimension_semantics=("parallel",),
                vmem_limit_bytes=vmem_limit,
            ),
            cost_estimate=pl.CostEstimate(
                flops=flops, transcendentals=0, bytes_accessed=bytes_accessed),
        )(*operands)
        jax.block_until_ready(out)   # surface lowering/runtime failures here
        return out

    try:
        return build_and_run(True)
    except Exception:
        # Installed JAX rejected single-buffered pipeline_mode; fall back to
        # default double-buffered specs (correct, just 2x weight VMEM).
        return build_and_run(False)


# -----------------------------------------------------------------------------
# Public forward.
# -----------------------------------------------------------------------------
def dnn_forward(x, params, *, use_bf16_mxu=False):
    """Fused forward pass of DNN: x -> [Linear -> ReLU] * L (dropout p=0, no BN).

    x:      (..., Din) float; leading dims are flattened into the batch.
    params: list of (w: (Din_i, Dout_i), b: (Dout_i,)) float32
            (PyTorch nn.Linear weights pre-transposed to (in, out)).
    use_bf16_mxu: store weights / feed the MXU in bf16 (f32 accumulation,
            bias add and ReLU stay f32).  Recommended on v6e/v7x; slightly
            changes numerics vs. the exact-f32 PyTorch reference.
    """
    orig_shape = x.shape
    Din = orig_shape[-1]
    x2 = x.reshape(-1, Din).astype(jnp.float32)
    B = x2.shape[0]
    dims = [Din] + [w.shape[1] for (w, _) in params]
    dims_p = [_round_up(d, _LANE) for d in dims]

    gen = _tpu_generation()
    vmem_cap = _vmem_capacity_bytes(gen)
    tm = _choose_tm(B, dims_p, gen)
    B_p = _round_up(B, tm)

    mxu_dtype = jnp.bfloat16 if use_bf16_mxu else jnp.float32
    w_itemsize = jnp.dtype(mxu_dtype).itemsize
    groups = _split_layer_groups(dims_p, tm, w_itemsize,
                                 budget=int(0.7 * vmem_cap))

    # Pad input: zeros in padded rows/cols (exact; see header comment).
    h = jnp.zeros((B_p, dims_p[0]), jnp.float32).at[:B, :Din].set(x2)

    # TODO(synk): for repeated inference, prefetch the weight HBM->VMEM DMAs in
    # a prior pallas_call (cross-call SEMAPHORE/VMEM futures) so the first
    # matmul never waits on the full weight DMA.
    for (g0, g1) in groups:
        h = _fused_group_call(
            h, params[g0:g1], dims[g0:g1 + 1], dims_p[g0:g1 + 1],
            tm, B_p, mxu_dtype, vmem_cap)

    out = h[:B, :dims[-1]]
    return out.reshape(orig_shape[:-1] + (dims[-1],))


def init_dnn_params(key, inputs_dim, hidden_units, init_std=1e-4):
    """Mirror DNN.__init__: weights ~ Normal(0, init_std); biases keep the
    nn.Linear default U(-1/sqrt(fan_in), +1/sqrt(fan_in))."""
    dims = [inputs_dim] + list(hidden_units)
    params = []
    for i in range(len(dims) - 1):
        key, kw, kb = jax.random.split(key, 3)
        fan_in, fan_out = dims[i], dims[i + 1]
        w = init_std * jax.random.normal(kw, (fan_in, fan_out), dtype=jnp.float32)
        bound = 1.0 / (fan_in ** 0.5)
        b = jax.random.uniform(
            kb, (fan_out,), dtype=jnp.float32, minval=-bound, maxval=bound)
        params.append((w, b))
    return params


if __name__ == "__main__":
    key = jax.random.PRNGKey(0)
    batch = 2
    inputs_dim = 32
    hidden_units = (64, 32)

    k_in, k_par = jax.random.split(key)
    x = jax.random.normal(k_in, (batch, inputs_dim), dtype=jnp.float32)
    params = init_dnn_params(k_par, inputs_dim, hidden_units)

    # Pure-JAX reference (Linear -> ReLU per layer, dropout p=0, use_bn=False).
    ref = x
    for (w, b) in params:
        ref = jnp.maximum(ref @ w + b.reshape(1, -1), 0.0)

    # Exact-f32 path (matches the PyTorch module's numerics).
    out = dnn_forward(x, params)
    jax.block_until_ready(out)
    assert out.shape == (batch, hidden_units[-1])
    assert bool(jnp.all(out >= 0.0))                       # ReLU output non-negative
    assert bool(jnp.allclose(out, ref, atol=1e-5, rtol=1e-5))

    # bf16-MXU path (recommended on v6e/v7x): f32 accumulation, looser match.
    out_bf16 = dnn_forward(x, params, use_bf16_mxu=True)
    jax.block_until_ready(out_bf16)
    assert out_bf16.shape == (batch, hidden_units[-1])
    assert bool(jnp.allclose(out_bf16, ref, atol=1e-2, rtol=2e-2))

    print("KERNEL_OK")
</pallas_src>

<mosaic_0001>
module attributes {stable_mosaic.version = 11 : i64} {
  func.func @kernel(%arg0: i32, %arg1: memref<8x128xf32, #tpu.memory_space<vmem>>, %arg2: memref<128x128xf32, #tpu.memory_space<vmem>>, %arg3: memref<1x128xf32, #tpu.memory_space<vmem>>, %arg4: memref<128x128xf32, #tpu.memory_space<vmem>>, %arg5: memref<1x128xf32, #tpu.memory_space<vmem>>, %arg6: memref<8x128xf32, #tpu.memory_space<vmem>>) attributes {dimension_semantics = [#tpu.dimension_semantics<parallel>], iteration_bounds = array<i64: 1>, scalar_prefetch = 0 : i64, scratch_operands = 0 : i64, tpu.core_type = #tpu.core_type<tc>, window_params = [{transform_indices = @transform_0, window_bounds = array<i64: 8, 128>}, {pipeline_mode = #tpu.pipeline_mode<synchronous>, transform_indices = @transform_1, window_bounds = array<i64: 128, 128>}, {pipeline_mode = #tpu.pipeline_mode<synchronous>, transform_indices = @transform_2, window_bounds = array<i64: 1, 128>}, {pipeline_mode = #tpu.pipeline_mode<synchronous>, transform_indices = @transform_3, window_bounds = array<i64: 128, 128>}, {pipeline_mode = #tpu.pipeline_mode<synchronous>, transform_indices = @transform_4, window_bounds = array<i64: 1, 128>}, {transform_indices = @transform_5, window_bounds = array<i64: 8, 128>}]} {
    %c0 = arith.constant 0 : index
    %c0_0 = arith.constant 0 : index
    %0 = vector.load %arg1[%c0, %c0_0] : memref<8x128xf32, #tpu.memory_space<vmem>>, vector<8x128xf32>
    %c0_1 = arith.constant 0 : index
    %c0_2 = arith.constant 0 : index
    %1 = vector.load %arg2[%c0_1, %c0_2] : memref<128x128xf32, #tpu.memory_space<vmem>>, vector<128x128xf32>
    %c0_3 = arith.constant 0 : index
    %c0_4 = arith.constant 0 : index
    %2 = vector.load %arg3[%c0_3, %c0_4] : memref<1x128xf32, #tpu.memory_space<vmem>>, vector<1x128xf32>
    %cst = arith.constant dense<0.000000e+00> : vector<8x128xf32>
    %3 = tpu.matmul %0, %1, %cst {dimension_numbers = #tpu.dot_dimension_numbers<[1], [0], [0], [1], [0, 0, 1, 1], [], []>} : vector<8x128xf32>, vector<128x128xf32>, vector<8x128xf32> -> vector<8x128xf32>
    %4 = vector.broadcast %2 : vector<1x128xf32> to vector<8x128xf32>
    %5 = arith.addf %3, %4 : vector<8x128xf32>
    %cst_5 = arith.constant 0.000000e+00 : f32
    %6 = vector.broadcast %cst_5 : f32 to vector<8x128xf32>
    %7 = arith.maximumf %5, %6 : vector<8x128xf32>
    %c0_6 = arith.constant 0 : index
    %c0_7 = arith.constant 0 : index
    %8 = vector.load %arg4[%c0_6, %c0_7] : memref<128x128xf32, #tpu.memory_space<vmem>>, vector<128x128xf32>
    %c0_8 = arith.constant 0 : index
    %c0_9 = arith.constant 0 : index
    %9 = vector.load %arg5[%c0_8, %c0_9] : memref<1x128xf32, #tpu.memory_space<vmem>>, vector<1x128xf32>
    %cst_10 = arith.constant dense<0.000000e+00> : vector<8x128xf32>
    %10 = tpu.matmul %7, %8, %cst_10 {dimension_numbers = #tpu.dot_dimension_numbers<[1], [0], [0], [1], [0, 0, 1, 1], [], []>} : vector<8x128xf32>, vector<128x128xf32>, vector<8x128xf32> -> vector<8x128xf32>
    %11 = vector.broadcast %9 : vector<1x128xf32> to vector<8x128xf32>
    %12 = arith.addf %10, %11 : vector<8x128xf32>
    %cst_11 = arith.constant 0.000000e+00 : f32
    %13 = vector.broadcast %cst_11 : f32 to vector<8x128xf32>
    %14 = arith.maximumf %12, %13 : vector<8x128xf32>
    %c0_12 = arith.constant 0 : index
    %c0_13 = arith.constant 0 : index
    %15 = vector.load %arg6[%c0_12, %c0_13] : memref<8x128xf32, #tpu.memory_space<vmem>>, vector<8x128xf32>
    tpu.vector_store %arg6[%c0_12, %c0_13], %14 {strides = array<i32>} : memref<8x128xf32, #tpu.memory_space<vmem>>, vector<8x128xf32>,
    return
  }
  func.func @transform_0(%arg0: i32) -> (i32, i32) {
    %c0_i32 = arith.constant 0 : i32
    %c0_i32_0 = arith.constant 0 : i32
    return %arg0, %c0_i32 : i32, i32
  }
  func.func @transform_1(%arg0: i32) -> (i32, i32) {
    %c0_i32 = arith.constant 0 : i32
    %c0_i32_0 = arith.constant 0 : i32
    %c0_i32_1 = arith.constant 0 : i32
    return %c0_i32, %c0_i32_0 : i32, i32
  }
  func.func @transform_2(%arg0: i32) -> (i32, i32) {
    %c0_i32 = arith.constant 0 : i32
    %c0_i32_0 = arith.constant 0 : i32
    %c0_i32_1 = arith.constant 0 : i32
    return %c0_i32, %c0_i32_0 : i32, i32
  }
  func.func @transform_3(%arg0: i32) -> (i32, i32) {
    %c0_i32 = arith.constant 0 : i32
    %c0_i32_0 = arith.constant 0 : i32
    %c0_i32_1 = arith.constant 0 : i32
    return %c0_i32, %c0_i32_0 : i32, i32
  }
  func.func @transform_4(%arg0: i32) -> (i32, i32) {
    %c0_i32 = arith.constant 0 : i32
    %c0_i32_0 = arith.constant 0 : i32
    %c0_i32_1 = arith.constant 0 : i32
    return %c0_i32, %c0_i32_0 : i32, i32
  }
  func.func @transform_5(%arg0: i32) -> (i32, i32) {
    %c0_i32 = arith.constant 0 : i32
    %c0_i32_0 = arith.constant 0 : i32
    return %arg0, %c0_i32 : i32, i32
  }
}

module attributes {stable_mosaic.version = 11 : i64} {
  func.func @kernel(%arg0: i32, %arg1: memref<8x128xf32, #tpu.memory_space<vmem>>, %arg2: memref<128x128xf32, #tpu.memory_space<vmem>>, %arg3: memref<1x128xf32, #tpu.memory_space<vmem>>, %arg4: memref<128x128xf32, #tpu.memory_space<vmem>>, %arg5: memref<1x128xf32, #tpu.memory_space<vmem>>, %arg6: memref<8x128xf32, #tpu.memory_space<vmem>>) attributes {dimension_semantics = [#tpu.dimension_semantics<parallel>], iteration_bounds = array<i64: 1>, scalar_prefetch = 0 : i64, scratch_operands = 0 : i64, tpu.core_type = #tpu.core_type<tc>, window_params = [{transform_indices = @transform_0, window_bounds = array<i64: 8, 128>}, {pipeline_mode = #tpu.pipeline_mode<synchronous>, transform_indices = @transform_1, window_bounds = array<i64: 128, 128>}, {pipeline_mode = #tpu.pipeline_mode<synchronous>, transform_indices = @transform_2, window_bounds = array<i64: 1, 128>}, {pipeline_mode = #tpu.pipeline_mode<synchronous>, transform_indices = @transform_3, window_bounds = array<i64: 128, 128>}, {pipeline_mode = #tpu.pipeline_mode<synchronous>, transform_indices = @transform_4, window_bounds = array<i64: 1, 128>}, {transform_indices = @transform_5, window_bounds = array<i64: 8, 128>}]} {
    %c0 = arith.constant 0 : index
    %c0_0 = arith.constant 0 : index
    %0 = vector.load %arg1[%c0, %c0_0] : memref<8x128xf32, #tpu.memory_space<vmem>>, vector<8x128xf32>
    %c0_1 = arith.constant 0 : index
    %c0_2 = arith.constant 0 : index
    %1 = vector.load %arg2[%c0_1, %c0_2] : memref<128x128xf32, #tpu.memory_space<vmem>>, vector<128x128xf32>
    %c0_3 = arith.constant 0 : index
    %c0_4 = arith.constant 0 : index
    %2 = vector.load %arg3[%c0_3, %c0_4] : memref<1x128xf32, #tpu.memory_space<vmem>>, vector<1x128xf32>
    %cst = arith.constant dense<0.000000e+00> : vector<8x128xf32>
    %3 = tpu.matmul %0, %1, %cst {dimension_numbers = #tpu.dot_dimension_numbers<[1], [0], [0], [1], [0, 0, 1, 1], [], []>} : vector<8x128xf32>, vector<128x128xf32>, vector<8x128xf32> -> vector<8x128xf32>
    %4 = vector.broadcast %2 : vector<1x128xf32> to vector<8x128xf32>
    %5 = arith.addf %3, %4 : vector<8x128xf32>
    %cst_5 = arith.constant 0.000000e+00 : f32
    %6 = vector.broadcast %cst_5 : f32 to vector<8x128xf32>
    %7 = arith.maximumf %5, %6 : vector<8x128xf32>
    %c0_6 = arith.constant 0 : index
    %c0_7 = arith.constant 0 : index
    %8 = vector.load %arg4[%c0_6, %c0_7] : memref<128x128xf32, #tpu.memory_space<vmem>>, vector<128x128xf32>
    %c0_8 = arith.constant 0 : index
    %c0_9 = arith.constant 0 : index
    %9 = vector.load %arg5[%c0_8, %c0_9] : memref<1x128xf32, #tpu.memory_space<vmem>>, vector<1x128xf32>
    %cst_10 = arith.constant dense<0.000000e+00> : vector<8x128xf32>
    %10 = tpu.matmul %7, %8, %cst_10 {dimension_numbers = #tpu.dot_dimension_numbers<[1], [0], [0], [1], [0, 0, 1, 1], [], []>} : vector<8x128xf32>, vector<128x128xf32>, vector<8x128xf32> -> vector<8x128xf32>
    %11 = vector.broadcast %9 : vector<1x128xf32> to vector<8x128xf32>
    %12 = arith.addf %10, %11 : vector<8x128xf32>
    %cst_11 = arith.constant 0.000000e+00 : f32
    %13 = vector.broadcast %cst_11 : f32 to vector<8x128xf32>
    %14 = arith.maximumf %12, %13 : vector<8x128xf32>
    %c0_12 = arith.constant 0 : index
    %c0_13 = arith.constant 0 : index
    %15 = vector.load %arg6[%c0_12, %c0_13] : memref<8x128xf32, #tpu.memory_space<vmem>>, vector<8x128xf32>
    tpu.vector_store %arg6[%c0_12, %c0_13], %14 {strides = array<i32>} : memref<8x128xf32, #tpu.memory_space<vmem>>, vector<8x128xf32>,
    return
  }
  func.func @transform_0(%arg0: i32) -> (i32, i32) {
    %c0_i32 = arith.constant 0 : i32
    %c0_i32_0 = arith.constant 0 : i32
    return %arg0, %c0_i32 : i32, i32
  }
  func.func @transform_1(%arg0: i32) -> (i32, i32) {
    %c0_i32 = arith.constant 0 : i32
    %c0_i32_0 = arith.constant 0 : i32
    %c0_i32_1 = arith.constant 0 : i32
    return %c0_i32, %c0_i32_0 : i32, i32
  }
  func.func @transform_2(%arg0: i32) -> (i32, i32) {
    %c0_i32 = arith.constant 0 : i32
    %c0_i32_0 = arith.constant 0 : i32
    %c0_i32_1 = arith.constant 0 : i32
    return %c0_i32, %c0_i32_0 : i32, i32
  }
  func.func @transform_3(%arg0: i32) -> (i32, i32) {
    %c0_i32 = arith.constant 0 : i32
    %c0_i32_0 = arith.constant 0 : i32
    %c0_i32_1 = arith.constant 0 : i32
    return %c0_i32, %c0_i32_0 : i32, i32
  }
  func.func @transform_4(%arg0: i32) -> (i32, i32) {
    %c0_i32 = arith.constant 0 : i32
    %c0_i32_0 = arith.constant 0 : i32
    %c0_i32_1 = arith.constant 0 : i32
    return %c0_i32, %c0_i32_0 : i32, i32
  }
  func.func @transform_5(%arg0: i32) -> (i32, i32) {
    %c0_i32 = arith.constant 0 : i32
    %c0_i32_0 = arith.constant 0 : i32
    return %arg0, %c0_i32 : i32, i32
  }
}

</mosaic_0001>

<llo_original>
// kernel: tpu_custom_call.1
$region0: #{tpu_custom_call.1}
  #allocation0 [shape = 'u32[]', space=smem, size = 0x4, offset = 0x4, fixed_abs, tag = 'smem constant byte address 0x4 - core index']
  #allocation1 [shape = 'u32[144,128]{1,0:T(1,128)}', space=vmem, size = 0x12000, scoped, tag = 'internal scratch']
  %s0 = inlined_call_operand.hbm [shape: f32[8,128], index: 0, kind: input, shape index: {}]
  %s1 = inlined_call_operand.hbm [shape: f32[128,128], index: 1, kind: input, shape index: {}]
  %s2 = inlined_call_operand.vmem [shape: f32[1,128], index: 2, kind: input, shape index: {}]
  %s3 = inlined_call_operand.hbm [shape: f32[128,128], index: 3, kind: input, shape index: {}]
  %s4 = inlined_call_operand.vmem [shape: f32[1,128], index: 4, kind: input, shape index: {}]
  %s5 = inlined_call_operand.hbm [shape: f32[8,128], index: 5, kind: output, shape index: {}]
  %s6 = sld [smem:[#allocation0]]
  $region42: #{tpu_custom_call.1} parent=0
    _
  %s8 = ssub.s32 1, %s6
  %s9 = scalar_select 0, %s8, %s6
  $region1: #{tpu_custom_call.1} parent=0
    #allocation2 [shape = 'u8[4096]{0}', space=vmem, size = 0x1000, scoped, tag = 'input window, operand 0, single buffered']
    #allocation3 [shape = 's32[1]{0}', space=sflag, size = 0x4, scoped, tag = 'scoped memory for tpu_custom_call.1']
    #allocation4 [shape = 's32[1]{0}', space=sflag, size = 0x4, scoped, tag = 'scoped memory for tpu_custom_call.1']
    #allocation5 [shape = 'u8[65536]{0}', space=vmem, size = 0x10000, scoped, tag = 'input window, operand 1, single buffered']
    #allocation6 [shape = 's32[1]{0}', space=sflag, size = 0x4, scoped, tag = 'scoped memory for tpu_custom_call.1']
    #allocation7 [shape = 'u8[65536]{0}', space=vmem, size = 0x10000, scoped, tag = 'input window, operand 3, single buffered']
    #allocation8 [shape = 'u8[4096]{0}', space=vmem, size = 0x1000, scoped, tag = 'output window, operand 0, single buffered']
    %10 = vsyncpa [#allocation3], 0
    %11 = vsyncpa [#allocation6], 0
    %12 = vsyncpa [#allocation4], 0
    // Predicated region
    $region2: #{tpu_custom_call.1} parent=1 // pred_check
      _
    $region3: #{tpu_custom_call.1} parent=1 // pred_check_branch
      %14 = sbr.rel (0) target = $region5
    $region4: #{tpu_custom_call.1} parent=1 // pred_region
      %s16 = ssub.s32 128, 128
      %17 = vsyncadd [#allocation3], %s16
      %s19 = sshll.u32 [#allocation2], 4
      %s20 = int_to_ptr.vmem [resolvable:$true] %s19
      %22 = dma.hbm_to_vmem [thread:$0]  %s0, 128, %s20, [#allocation3]
    $region5: #{tpu_custom_call.1} parent=1 // pred_fallthru
      _
    // Predicated region
    $region6: #{tpu_custom_call.1} parent=1 // pred_check
      _
    $region7: #{tpu_custom_call.1} parent=1 // pred_check_branch
      %24 = sbr.rel (0) target = $region9
    $region8: #{tpu_custom_call.1} parent=1 // pred_region
      %s26 = ssub.s32 2048, 2048
      %27 = vsyncadd [#allocation6], %s26
      %s28 = sshll.u32 [#allocation5], 4
      %s29 = int_to_ptr.vmem [resolvable:$true] %s28
      %34 = dma.hbm_to_vmem [thread:$0]  %s1, 2048, %s29, [#allocation6], 128, 128, 8
    $region9: #{tpu_custom_call.1} parent=1 // pred_fallthru
      _
    // Predicated region
    $region10: #{tpu_custom_call.1} parent=1 // pred_check
      _
    $region11: #{tpu_custom_call.1} parent=1 // pred_check_branch
      %36 = sbr.rel (0) target = $region13
    $region12: #{tpu_custom_call.1} parent=1 // pred_region
      _
    $region13: #{tpu_custom_call.1} parent=1 // pred_fallthru
      _
    // Predicated region
    $region14: #{tpu_custom_call.1} parent=1 // pred_check
      _
    $region15: #{tpu_custom_call.1} parent=1 // pred_check_branch
      %38 = sbr.rel (0) target = $region17
    $region16: #{tpu_custom_call.1} parent=1 // pred_region
      %s40 = ssub.s32 2048, 2048
      %41 = vsyncadd [#allocation6], %s40
      %s42 = sshll.u32 [#allocation7], 4
      %s43 = int_to_ptr.vmem [resolvable:$true] %s42
      %48 = dma.hbm_to_vmem [thread:$0]  %s3, 2048, %s43, [#allocation6], 128, 128, 8
    $region17: #{tpu_custom_call.1} parent=1 // pred_fallthru
      _
    // Predicated region
    $region18: #{tpu_custom_call.1} parent=1 // pred_check
      _
    $region19: #{tpu_custom_call.1} parent=1 // pred_check_branch
      %50 = sbr.rel (0) target = $region21
    $region20: #{tpu_custom_call.1} parent=1 // pred_region
      _
    $region21: #{tpu_custom_call.1} parent=1 // pred_fallthru
      _
    // Predicated region
    $region22: #{tpu_custom_call.1} parent=1 // pred_check
      _
    $region23: #{tpu_custom_call.1} parent=1 // pred_check_branch
      %52 = sbr.rel (0) target = $region25
    $region24: #{tpu_custom_call.1} parent=1 // pred_region
      %53 = dma.done [#allocation3], 128
    $region25: #{tpu_custom_call.1} parent=1 // pred_fallthru
      _
    // Predicated region
    $region26: #{tpu_custom_call.1} parent=1 // pred_check
      _
    $region27: #{tpu_custom_call.1} parent=1 // pred_check_branch
      %55 = sbr.rel (0) target = $region29
    $region28: #{tpu_custom_call.1} parent=1 // pred_region
      %56 = dma.done [#allocation6], 2048
    $region29: #{tpu_custom_call.1} parent=1 // pred_fallthru
      _
    // Predicated region
    $region30: #{tpu_custom_call.1} parent=1 // pred_check
      _
    $region31: #{tpu_custom_call.1} parent=1 // pred_check_branch
      %58 = sbr.rel (0) target = $region33
    $region32: #{tpu_custom_call.1} parent=1 // pred_region
      %59 = dma.done [#allocation6], 2048
    $region33: #{tpu_custom_call.1} parent=1 // pred_fallthru
      _
    %v60 = vld [vmem:[#allocation2] sm:$0xff]
    %v61 = vld [vmem:[#allocation5] sm:$0xff]
    %v62 = vld [vmem:[#allocation5 + $0x8] sm:$0xff]
    %v63 = vld [vmem:[#allocation5 + $0x10] sm:$0xff]
    %v64 = vld [vmem:[#allocation5 + $0x18] sm:$0xff]
    %v65 = vld [vmem:[#allocation5 + $0x20] sm:$0xff]
    %v66 = vld [vmem:[#allocation5 + $0x28] sm:$0xff]
    %v67 = vld [vmem:[#allocation5 + $0x30] sm:$0xff]
    %v68 = vld [vmem:[#allocation5 + $0x38] sm:$0xff]
    %v69 = vld [vmem:[#allocation5 + $0x40] sm:$0xff]
    %v70 = vld [vmem:[#allocation5 + $0x48] sm:$0xff]
    %v71 = vld [vmem:[#allocation5 + $0x50] sm:$0xff]
    %v72 = vld [vmem:[#allocation5 + $0x58] sm:$0xff]
    %v73 = vld [vmem:[#allocation5 + $0x60] sm:$0xff]
    %v74 = vld [vmem:[#allocation5 + $0x68] sm:$0xff]
    %v75 = vld [vmem:[#allocation5 + $0x70] sm:$0xff]
    %v76 = vld [vmem:[#allocation5 + $0x78] sm:$0xff]
    %v77 = vld [vmem:[%s2] sm:$0x1]
    %v79 = vlaneseq
    %v80 = vshrl.u32 %v79, 7
    %v81 = vsub.s32 0, %v80
    %v82 = vrot.slane %v77, %v81
    %84 = vmatprep.subr.mxu0 0.0
    %85 = vmatpush1.msra.mxu0 %v61
    %86 = vmatprep.subr.mxu0 0.0
    %87 = vmatpush1.msra.mxu0 %v62
    %88 = vmatprep.subr.mxu0 0.0
    %89 = vmatpush1.msra.mxu0 %v63
    %90 = vmatprep.subr.mxu0 0.0
    %91 = vmatpush1.msra.mxu0 %v64
    %92 = vmatprep.subr.mxu0 0.0
    %93 = vmatpush1.msra.mxu0 %v65
    %94 = vmatprep.subr.mxu0 0.0
    %95 = vmatpush1.msra.mxu0 %v66
    %96 = vmatprep.subr.mxu0 0.0
    %97 = vmatpush1.msra.mxu0 %v67
    %98 = vmatprep.subr.mxu0 0.0
    %99 = vmatpush1.msra.mxu0 %v68
    %100 = vmatprep.subr.mxu0 0.0
    %101 = vmatpush1.msra.mxu0 %v69
    %102 = vmatprep.subr.mxu0 0.0
    %103 = vmatpush1.msra.mxu0 %v70
    %104 = vmatprep.subr.mxu0 0.0
    %105 = vmatpush1.msra.mxu0 %v71
    %106 = vmatprep.subr.mxu0 0.0
    %107 = vmatpush1.msra.mxu0 %v72
    %108 = vmatprep.subr.mxu0 0.0
    %109 = vmatpush1.msra.mxu0 %v73
    %110 = vmatprep.subr.mxu0 0.0
    %111 = vmatpush1.msra.mxu0 %v74
    %112 = vmatprep.subr.mxu0 0.0
    %113 = vmatpush1.msra.mxu0 %v75
    %114 = vmatprep.subr.mxu0 0.0
    %115 = vmatpush1.msra.mxu0 %v76
    %116 = vmatprep.subr.mxu0 0.0
    %117 = vmatpush1.msra.mxu0 0.0
    %118 = vmatprep.subr.mxu0 0.0
    %119 = vmatpush1.msra.mxu0 0.0
    %120 = vmatprep.subr.mxu0 0.0
    %121 = vmatpush1.msra.mxu0 0.0
    %122 = vmatprep.subr.mxu0 0.0
    %123 = vmatpush1.msra.mxu0 0.0
    %124 = vmatprep.subr.mxu0 0.0
    %125 = vmatpush1.msra.mxu0 0.0
    %126 = vmatprep.subr.mxu0 0.0
    %127 = vmatpush1.msra.mxu0 0.0
    %128 = vmatprep.subr.mxu0 0.0
    %129 = vmatpush1.msra.mxu0 0.0
    %130 = vmatprep.subr.mxu0 0.0
    %131 = vmatpush1.msra.mxu0 0.0
    %132 = vmatprep.subr.mxu0 0.0
    %133 = vmatpush1.msra.mxu0 0.0
    %134 = vmatprep.subr.mxu0 0.0
    %135 = vmatpush1.msra.mxu0 0.0
    %136 = vmatprep.subr.mxu0 0.0
    %137 = vmatpush1.msra.mxu0 0.0
    %138 = vmatprep.subr.mxu0 0.0
    %139 = vmatpush1.msra.mxu0 0.0
    %140 = vmatprep.subr.mxu0 0.0
    %141 = vmatpush1.msra.mxu0 0.0
    %142 = vmatprep.subr.mxu0 0.0
    %143 = vmatpush1.msra.mxu0 0.0
    %144 = vmatprep.subr.mxu0 0.0
    %145 = vmatpush1.msra.mxu0 0.0
    %146 = vmatprep.subr.mxu0 0.0
    %147 = vmatpush1.msra.mxu0 0.0
    %148 = vmatprep.mubr.f32.mxu0 0.0
    %149 = vmatmul.mubr.f32.gmra.mrb[0].mxu0 %v60
    %v150 = vpop.f32.mrb[0].mxu0
    %v151 = vadd.f32 %v82, %v150
    %v152 = vpop.f32.mrb[0].mxu0
    %153 = vdwg.mxu0
    %v154 = vmax.f32 %v151, 0.0
    %v155 = vld [vmem:[#allocation7] sm:$0xff]
    %v156 = vld [vmem:[#allocation7 + $0x8] sm:$0xff]
    %v157 = vld [vmem:[#allocation7 + $0x10] sm:$0xff]
    %v158 = vld [vmem:[#allocation7 + $0x18] sm:$0xff]
    %v159 = vld [vmem:[#allocation7 + $0x20] sm:$0xff]
    %v160 = vld [vmem:[#allocation7 + $0x28] sm:$0xff]
    %v161 = vld [vmem:[#allocation7 + $0x30] sm:$0xff]
    %v162 = vld [vmem:[#allocation7 + $0x38] sm:$0xff]
    %v163 = vld [vmem:[#allocation7 + $0x40] sm:$0xff]
    %v164 = vld [vmem:[#allocation7 + $0x48] sm:$0xff]
    %v165 = vld [vmem:[#allocation7 + $0x50] sm:$0xff]
    %v166 = vld [vmem:[#allocation7 + $0x58] sm:$0xff]
    %v167 = vld [vmem:[#allocation7 + $0x60] sm:$0xff]
    %v168 = vld [vmem:[#allocation7 + $0x68] sm:$0xff]
    %v169 = vld [vmem:[#allocation7 + $0x70] sm:$0xff]
    %v170 = vld [vmem:[#allocation7 + $0x78] sm:$0xff]
    %v171 = vld [vmem:[%s4] sm:$0x1]
    %v173 = vlaneseq
    %v174 = vshrl.u32 %v173, 7
    %v175 = vsub.s32 0, %v174
    %v176 = vrot.slane %v171, %v175
    %178 = vmatprep.subr.mxu0 0.0
    %179 = vmatpush1.msra.mxu0 %v155
    %180 = vmatprep.subr.mxu0 0.0
    %181 = vmatpush1.msra.mxu0 %v156
    %182 = vmatprep.subr.mxu0 0.0
    %183 = vmatpush1.msra.mxu0 %v157
    %184 = vmatprep.subr.mxu0 0.0
    %185 = vmatpush1.msra.mxu0 %v158
    %186 = vmatprep.subr.mxu0 0.0
    %187 = vmatpush1.msra.mxu0 %v159
    %188 = vmatprep.subr.mxu0 0.0
    %189 = vmatpush1.msra.mxu0 %v160
    %190 = vmatprep.subr.mxu0 0.0
    %191 = vmatpush1.msra.mxu0 %v161
    %192 = vmatprep.subr.mxu0 0.0
    %193 = vmatpush1.msra.mxu0 %v162
    %194 = vmatprep.subr.mxu0 0.0
    %195 = vmatpush1.msra.mxu0 %v163
    %196 = vmatprep.subr.mxu0 0.0
    %197 = vmatpush1.msra.mxu0 %v164
    %198 = vmatprep.subr.mxu0 0.0
    %199 = vmatpush1.msra.mxu0 %v165
    %200 = vmatprep.subr.mxu0 0.0
    %201 = vmatpush1.msra.mxu0 %v166
    %202 = vmatprep.subr.mxu0 0.0
    %203 = vmatpush1.msra.mxu0 %v167
    %204 = vmatprep.subr.mxu0 0.0
    %205 = vmatpush1.msra.mxu0 %v168
    %206 = vmatprep.subr.mxu0 0.0
    %207 = vmatpush1.msra.mxu0 %v169
    %208 = vmatprep.subr.mxu0 0.0
    %209 = vmatpush1.msra.mxu0 %v170
    %210 = vmatprep.subr.mxu0 0.0
    %211 = vmatpush1.msra.mxu0 0.0
    %212 = vmatprep.subr.mxu0 0.0
    %213 = vmatpush1.msra.mxu0 0.0
    %214 = vmatprep.subr.mxu0 0.0
    %215 = vmatpush1.msra.mxu0 0.0
    %216 = vmatprep.subr.mxu0 0.0
    %217 = vmatpush1.msra.mxu0 0.0
    %218 = vmatprep.subr.mxu0 0.0
    %219 = vmatpush1.msra.mxu0 0.0
    %220 = vmatprep.subr.mxu0 0.0
    %221 = vmatpush1.msra.mxu0 0.0
    %222 = vmatprep.subr.mxu0 0.0
    %223 = vmatpush1.msra.mxu0 0.0
    %224 = vmatprep.subr.mxu0 0.0
    %225 = vmatpush1.msra.mxu0 0.0
    %226 = vmatprep.subr.mxu0 0.0
    %227 = vmatpush1.msra.mxu0 0.0
    %228 = vmatprep.subr.mxu0 0.0
    %229 = vmatpush1.msra.mxu0 0.0
    %230 = vmatprep.subr.mxu0 0.0
    %231 = vmatpush1.msra.mxu0 0.0
    %232 = vmatprep.subr.mxu0 0.0
    %233 = vmatpush1.msra.mxu0 0.0
    %234 = vmatprep.subr.mxu0 0.0
    %235 = vmatpush1.msra.mxu0 0.0
    %236 = vmatprep.subr.mxu0 0.0
    %237 = vmatpush1.msra.mxu0 0.0
    %238 = vmatprep.subr.mxu0 0.0
    %239 = vmatpush1.msra.mxu0 0.0
    %240 = vmatprep.subr.mxu0 0.0
    %241 = vmatpush1.msra.mxu0 0.0
    %242 = vmatprep.mubr.f32.mxu0 0.0
    %243 = vmatmul.mubr.f32.gmra.mrb[0].mxu0 %v154
    %v244 = vpop.f32.mrb[0].mxu0
    %v245 = vadd.f32 %v176, %v244
    %v246 = vpop.f32.mrb[0].mxu0
    %247 = vdwg.mxu0
    %v248 = vmax.f32 %v245, 0.0
    %249 = vst [vmem:[#allocation8] sm:$0xff] %v248
    // Predicated region
    $region34: #{tpu_custom_call.1} parent=1 // pred_check
      _
    $region35: #{tpu_custom_call.1} parent=1 // pred_check_branch
      %251 = sbr.rel (0) target = $region37
    $region36: #{tpu_custom_call.1} parent=1 // pred_region
      %s253 = ssub.s32 128, 128
      %254 = vsyncadd [#allocation4], %s253
      %s256 = sshll.u32 [#allocation8], 4
      %s257 = int_to_ptr.vmem [resolvable:$true] %s256
      %259 = dma.vmem_to_hbm [thread:$0]  %s257, 128, %s5, [#allocation4]
    $region37: #{tpu_custom_call.1} parent=1 // pred_fallthru
      _
    // Predicated region
    $region38: #{tpu_custom_call.1} parent=1 // pred_check
      _
    $region39: #{tpu_custom_call.1} parent=1 // pred_check_branch
      %261 = sbr.rel (0) target = $region41
    $region40: #{tpu_custom_call.1} parent=1 // pred_region
      %262 = dma.done [#allocation4], 128
    $region41: #{tpu_custom_call.1} parent=1 // pred_fallthru
      _
    %263 = vsyncpa [#allocation3], 1
    %264 = vsyncpa [#allocation6], 1
    %265 = vsyncpa [#allocation4], 1

// kernel: tpu_custom_call.1
$region0: #{tpu_custom_call.1}
  #allocation0 [shape = 'u32[]', space=smem, size = 0x4, offset = 0x4, fixed_abs, tag = 'smem constant byte address 0x4 - core index']
  #allocation1 [shape = 'u32[144,128]{1,0:T(1,128)}', space=vmem, size = 0x12000, scoped, tag = 'internal scratch']
  %s0 = inlined_call_operand.hbm [shape: f32[8,128], index: 0, kind: input, shape index: {}]
  %s1 = inlined_call_operand.hbm [shape: f32[128,128], index: 1, kind: input, shape index: {}]
  %s2 = inlined_call_operand.vmem [shape: f32[1,128], index: 2, kind: input, shape index: {}]
  %s3 = inlined_call_operand.hbm [shape: f32[128,128], index: 3, kind: input, shape index: {}]
  %s4 = inlined_call_operand.vmem [shape: f32[1,128], index: 4, kind: input, shape index: {}]
  %s5 = inlined_call_operand.hbm [shape: f32[8,128], index: 5, kind: output, shape index: {}]
  %s6 = sld [smem:[#allocation0]]
  $region42: #{tpu_custom_call.1} parent=0
    _
  %s8 = ssub.s32 1, %s6
  %s9 = scalar_select 0, %s8, %s6
  $region1: #{tpu_custom_call.1} parent=0
    #allocation2 [shape = 'u8[4096]{0}', space=vmem, size = 0x1000, scoped, tag = 'input window, operand 0, single buffered']
    #allocation3 [shape = 's32[1]{0}', space=sflag, size = 0x4, scoped, tag = 'scoped memory for tpu_custom_call.1']
    #allocation4 [shape = 's32[1]{0}', space=sflag, size = 0x4, scoped, tag = 'scoped memory for tpu_custom_call.1']
    #allocation5 [shape = 'u8[65536]{0}', space=vmem, size = 0x10000, scoped, tag = 'input window, operand 1, single buffered']
    #allocation6 [shape = 's32[1]{0}', space=sflag, size = 0x4, scoped, tag = 'scoped memory for tpu_custom_call.1']
    #allocation7 [shape = 'u8[65536]{0}', space=vmem, size = 0x10000, scoped, tag = 'input window, operand 3, single buffered']
    #allocation8 [shape = 'u8[4096]{0}', space=vmem, size = 0x1000, scoped, tag = 'output window, operand 0, single buffered']
    %10 = vsyncpa [#allocation3], 0
    %11 = vsyncpa [#allocation6], 0
    %12 = vsyncpa [#allocation4], 0
    // Predicated region
    $region2: #{tpu_custom_call.1} parent=1 // pred_check
      _
    $region3: #{tpu_custom_call.1} parent=1 // pred_check_branch
      %14 = sbr.rel (0) target = $region5
    $region4: #{tpu_custom_call.1} parent=1 // pred_region
      %s16 = ssub.s32 128, 128
      %17 = vsyncadd [#allocation3], %s16
      %s19 = sshll.u32 [#allocation2], 4
      %s20 = int_to_ptr.vmem [resolvable:$true] %s19
      %22 = dma.hbm_to_vmem [thread:$0]  %s0, 128, %s20, [#allocation3]
    $region5: #{tpu_custom_call.1} parent=1 // pred_fallthru
      _
    // Predicated region
    $region6: #{tpu_custom_call.1} parent=1 // pred_check
      _
    $region7: #{tpu_custom_call.1} parent=1 // pred_check_branch
      %24 = sbr.rel (0) target = $region9
    $region8: #{tpu_custom_call.1} parent=1 // pred_region
      %s26 = ssub.s32 2048, 2048
      %27 = vsyncadd [#allocation6], %s26
      %s28 = sshll.u32 [#allocation5], 4
      %s29 = int_to_ptr.vmem [resolvable:$true] %s28
      %34 = dma.hbm_to_vmem [thread:$0]  %s1, 2048, %s29, [#allocation6], 128, 128, 8
    $region9: #{tpu_custom_call.1} parent=1 // pred_fallthru
      _
    // Predicated region
    $region10: #{tpu_custom_call.1} parent=1 // pred_check
      _
    $region11: #{tpu_custom_call.1} parent=1 // pred_check_branch
      %36 = sbr.rel (0) target = $region13
    $region12: #{tpu_custom_call.1} parent=1 // pred_region
      _
    $region13: #{tpu_custom_call.1} parent=1 // pred_fallthru
      _
    // Predicated region
    $region14: #{tpu_custom_call.1} parent=1 // pred_check
      _
    $region15: #{tpu_custom_call.1} parent=1 // pred_check_branch
      %38 = sbr.rel (0) target = $region17
    $region16: #{tpu_custom_call.1} parent=1 // pred_region
      %s40 = ssub.s32 2048, 2048
      %41 = vsyncadd [#allocation6], %s40
      %s42 = sshll.u32 [#allocation7], 4
      %s43 = int_to_ptr.vmem [resolvable:$true] %s42
      %48 = dma.hbm_to_vmem [thread:$0]  %s3, 2048, %s43, [#allocation6], 128, 128, 8
    $region17: #{tpu_custom_call.1} parent=1 // pred_fallthru
      _
    // Predicated region
    $region18: #{tpu_custom_call.1} parent=1 // pred_check
      _
    $region19: #{tpu_custom_call.1} parent=1 // pred_check_branch
      %50 = sbr.rel (0) target = $region21
    $region20: #{tpu_custom_call.1} parent=1 // pred_region
      _
    $region21: #{tpu_custom_call.1} parent=1 // pred_fallthru
      _
    // Predicated region
    $region22: #{tpu_custom_call.1} parent=1 // pred_check
      _
    $region23: #{tpu_custom_call.1} parent=1 // pred_check_branch
      %52 = sbr.rel (0) target = $region25
    $region24: #{tpu_custom_call.1} parent=1 // pred_region
      %53 = dma.done [#allocation3], 128
    $region25: #{tpu_custom_call.1} parent=1 // pred_fallthru
      _
    // Predicated region
    $region26: #{tpu_custom_call.1} parent=1 // pred_check
      _
    $region27: #{tpu_custom_call.1} parent=1 // pred_check_branch
      %55 = sbr.rel (0) target = $region29
    $region28: #{tpu_custom_call.1} parent=1 // pred_region
      %56 = dma.done [#allocation6], 2048
    $region29: #{tpu_custom_call.1} parent=1 // pred_fallthru
      _
    // Predicated region
    $region30: #{tpu_custom_call.1} parent=1 // pred_check
      _
    $region31: #{tpu_custom_call.1} parent=1 // pred_check_branch
      %58 = sbr.rel (0) target = $region33
    $region32: #{tpu_custom_call.1} parent=1 // pred_region
      %59 = dma.done [#allocation6], 2048
    $region33: #{tpu_custom_call.1} parent=1 // pred_fallthru
      _
    %v60 = vld [vmem:[#allocation2] sm:$0xff]
    %v61 = vld [vmem:[#allocation5] sm:$0xff]
    %v62 = vld [vmem:[#allocation5 + $0x8] sm:$0xff]
    %v63 = vld [vmem:[#allocation5 + $0x10] sm:$0xff]
    %v64 = vld [vmem:[#allocation5 + $0x18] sm:$0xff]
    %v65 = vld [vmem:[#allocation5 + $0x20] sm:$0xff]
    %v66 = vld [vmem:[#allocation5 + $0x28] sm:$0xff]
    %v67 = vld [vmem:[#allocation5 + $0x30] sm:$0xff]
    %v68 = vld [vmem:[#allocation5 + $0x38] sm:$0xff]
    %v69 = vld [vmem:[#allocation5 + $0x40] sm:$0xff]
    %v70 = vld [vmem:[#allocation5 + $0x48] sm:$0xff]
    %v71 = vld [vmem:[#allocation5 + $0x50] sm:$0xff]
    %v72 = vld [vmem:[#allocation5 + $0x58] sm:$0xff]
    %v73 = vld [vmem:[#allocation5 + $0x60] sm:$0xff]
    %v74 = vld [vmem:[#allocation5 + $0x68] sm:$0xff]
    %v75 = vld [vmem:[#allocation5 + $0x70] sm:$0xff]
    %v76 = vld [vmem:[#allocation5 + $0x78] sm:$0xff]
    %v77 = vld [vmem:[%s2] sm:$0x1]
    %v79 = vlaneseq
    %v80 = vshrl.u32 %v79, 7
    %v81 = vsub.s32 0, %v80
    %v82 = vrot.slane %v77, %v81
    %84 = vmatprep.subr.mxu0 0.0
    %85 = vmatpush1.msra.mxu0 %v61
    %86 = vmatprep.subr.mxu0 0.0
    %87 = vmatpush1.msra.mxu0 %v62
    %88 = vmatprep.subr.mxu0 0.0
    %89 = vmatpush1.msra.mxu0 %v63
    %90 = vmatprep.subr.mxu0 0.0
    %91 = vmatpush1.msra.mxu0 %v64
    %92 = vmatprep.subr.mxu0 0.0
    %93 = vmatpush1.msra.mxu0 %v65
    %94 = vmatprep.subr.mxu0 0.0
    %95 = vmatpush1.msra.mxu0 %v66
    %96 = vmatprep.subr.mxu0 0.0
    %97 = vmatpush1.msra.mxu0 %v67
    %98 = vmatprep.subr.mxu0 0.0
    %99 = vmatpush1.msra.mxu0 %v68
    %100 = vmatprep.subr.mxu0 0.0
    %101 = vmatpush1.msra.mxu0 %v69
    %102 = vmatprep.subr.mxu0 0.0
    %103 = vmatpush1.msra.mxu0 %v70
    %104 = vmatprep.subr.mxu0 0.0
    %105 = vmatpush1.msra.mxu0 %v71
    %106 = vmatprep.subr.mxu0 0.0
    %107 = vmatpush1.msra.mxu0 %v72
    %108 = vmatprep.subr.mxu0 0.0
    %109 = vmatpush1.msra.mxu0 %v73
    %110 = vmatprep.subr.mxu0 0.0
    %111 = vmatpush1.msra.mxu0 %v74
    %112 = vmatprep.subr.mxu0 0.0
    %113 = vmatpush1.msra.mxu0 %v75
    %114 = vmatprep.subr.mxu0 0.0
    %115 = vmatpush1.msra.mxu0 %v76
    %116 = vmatprep.subr.mxu0 0.0
    %117 = vmatpush1.msra.mxu0 0.0
    %118 = vmatprep.subr.mxu0 0.0
    %119 = vmatpush1.msra.mxu0 0.0
    %120 = vmatprep.subr.mxu0 0.0
    %121 = vmatpush1.msra.mxu0 0.0
    %122 = vmatprep.subr.mxu0 0.0
    %123 = vmatpush1.msra.mxu0 0.0
    %124 = vmatprep.subr.mxu0 0.0
    %125 = vmatpush1.msra.mxu0 0.0
    %126 = vmatprep.subr.mxu0 0.0
    %127 = vmatpush1.msra.mxu0 0.0
    %128 = vmatprep.subr.mxu0 0.0
    %129 = vmatpush1.msra.mxu0 0.0
    %130 = vmatprep.subr.mxu0 0.0
    %131 = vmatpush1.msra.mxu0 0.0
    %132 = vmatprep.subr.mxu0 0.0
    %133 = vmatpush1.msra.mxu0 0.0
    %134 = vmatprep.subr.mxu0 0.0
    %135 = vmatpush1.msra.mxu0 0.0
    %136 = vmatprep.subr.mxu0 0.0
    %137 = vmatpush1.msra.mxu0 0.0
    %138 = vmatprep.subr.mxu0 0.0
    %139 = vmatpush1.msra.mxu0 0.0
    %140 = vmatprep.subr.mxu0 0.0
    %141 = vmatpush1.msra.mxu0 0.0
    %142 = vmatprep.subr.mxu0 0.0
    %143 = vmatpush1.msra.mxu0 0.0
    %144 = vmatprep.subr.mxu0 0.0
    %145 = vmatpush1.msra.mxu0 0.0
    %146 = vmatprep.subr.mxu0 0.0
    %147 = vmatpush1.msra.mxu0 0.0
    %148 = vmatprep.mubr.f32.mxu0 0.0
    %149 = vmatmul.mubr.f32.gmra.mrb[0].mxu0 %v60
    %v150 = vpop.f32.mrb[0].mxu0
    %v151 = vadd.f32 %v82, %v150
    %v152 = vpop.f32.mrb[0].mxu0
    %153 = vdwg.mxu0
    %v154 = vmax.f32 %v151, 0.0
    %v155 = vld [vmem:[#allocation7] sm:$0xff]
    %v156 = vld [vmem:[#allocation7 + $0x8] sm:$0xff]
    %v157 = vld [vmem:[#allocation7 + $0x10] sm:$0xff]
    %v158 = vld [vmem:[#allocation7 + $0x18] sm:$0xff]
    %v159 = vld [vmem:[#allocation7 + $0x20] sm:$0xff]
    %v160 = vld [vmem:[#allocation7 + $0x28] sm:$0xff]
    %v161 = vld [vmem:[#allocation7 + $0x30] sm:$0xff]
    %v162 = vld [vmem:[#allocation7 + $0x38] sm:$0xff]
    %v163 = vld [vmem:[#allocation7 + $0x40] sm:$0xff]
    %v164 = vld [vmem:[#allocation7 + $0x48] sm:$0xff]
    %v165 = vld [vmem:[#allocation7 + $0x50] sm:$0xff]
    %v166 = vld [vmem:[#allocation7 + $0x58] sm:$0xff]
    %v167 = vld [vmem:[#allocation7 + $0x60] sm:$0xff]
    %v168 = vld [vmem:[#allocation7 + $0x68] sm:$0xff]
    %v169 = vld [vmem:[#allocation7 + $0x70] sm:$0xff]
    %v170 = vld [vmem:[#allocation7 + $0x78] sm:$0xff]
    %v171 = vld [vmem:[%s4] sm:$0x1]
    %v173 = vlaneseq
    %v174 = vshrl.u32 %v173, 7
    %v175 = vsub.s32 0, %v174
    %v176 = vrot.slane %v171, %v175
    %178 = vmatprep.subr.mxu0 0.0
    %179 = vmatpush1.msra.mxu0 %v155
    %180 = vmatprep.subr.mxu0 0.0
    %181 = vmatpush1.msra.mxu0 %v156
    %182 = vmatprep.subr.mxu0 0.0
    %183 = vmatpush1.msra.mxu0 %v157
    %184 = vmatprep.subr.mxu0 0.0
    %185 = vmatpush1.msra.mxu0 %v158
    %186 = vmatprep.subr.mxu0 0.0
    %187 = vmatpush1.msra.mxu0 %v159
    %188 = vmatprep.subr.mxu0 0.0
    %189 = vmatpush1.msra.mxu0 %v160
    %190 = vmatprep.subr.mxu0 0.0
    %191 = vmatpush1.msra.mxu0 %v161
    %192 = vmatprep.subr.mxu0 0.0
    %193 = vmatpush1.msra.mxu0 %v162
    %194 = vmatprep.subr.mxu0 0.0
    %195 = vmatpush1.msra.mxu0 %v163
    %196 = vmatprep.subr.mxu0 0.0
    %197 = vmatpush1.msra.mxu0 %v164
    %198 = vmatprep.subr.mxu0 0.0
    %199 = vmatpush1.msra.mxu0 %v165
    %200 = vmatprep.subr.mxu0 0.0
    %201 = vmatpush1.msra.mxu0 %v166
    %202 = vmatprep.subr.mxu0 0.0
    %203 = vmatpush1.msra.mxu0 %v167
    %204 = vmatprep.subr.mxu0 0.0
    %205 = vmatpush1.msra.mxu0 %v168
    %206 = vmatprep.subr.mxu0 0.0
    %207 = vmatpush1.msra.mxu0 %v169
    %208 = vmatprep.subr.mxu0 0.0
    %209 = vmatpush1.msra.mxu0 %v170
    %210 = vmatprep.subr.mxu0 0.0
    %211 = vmatpush1.msra.mxu0 0.0
    %212 = vmatprep.subr.mxu0 0.0
    %213 = vmatpush1.msra.mxu0 0.0
    %214 = vmatprep.subr.mxu0 0.0
    %215 = vmatpush1.msra.mxu0 0.0
    %216 = vmatprep.subr.mxu0 0.0
    %217 = vmatpush1.msra.mxu0 0.0
    %218 = vmatprep.subr.mxu0 0.0
    %219 = vmatpush1.msra.mxu0 0.0
    %220 = vmatprep.subr.mxu0 0.0
    %221 = vmatpush1.msra.mxu0 0.0
    %222 = vmatprep.subr.mxu0 0.0
    %223 = vmatpush1.msra.mxu0 0.0
    %224 = vmatprep.subr.mxu0 0.0
    %225 = vmatpush1.msra.mxu0 0.0
    %226 = vmatprep.subr.mxu0 0.0
    %227 = vmatpush1.msra.mxu0 0.0
    %228 = vmatprep.subr.mxu0 0.0
    %229 = vmatpush1.msra.mxu0 0.0
    %230 = vmatprep.subr.mxu0 0.0
    %231 = vmatpush1.msra.mxu0 0.0
    %232 = vmatprep.subr.mxu0 0.0
    %233 = vmatpush1.msra.mxu0 0.0
    %234 = vmatprep.subr.mxu0 0.0
    %235 = vmatpush1.msra.mxu0 0.0
    %236 = vmatprep.subr.mxu0 0.0
    %237 = vmatpush1.msra.mxu0 0.0
    %238 = vmatprep.subr.mxu0 0.0
    %239 = vmatpush1.msra.mxu0 0.0
    %240 = vmatprep.subr.mxu0 0.0
    %241 = vmatpush1.msra.mxu0 0.0
    %242 = vmatprep.mubr.f32.mxu0 0.0
    %243 = vmatmul.mubr.f32.gmra.mrb[0].mxu0 %v154
    %v244 = vpop.f32.mrb[0].mxu0
    %v245 = vadd.f32 %v176, %v244
    %v246 = vpop.f32.mrb[0].mxu0
    %247 = vdwg.mxu0
    %v248 = vmax.f32 %v245, 0.0
    %249 = vst [vmem:[#allocation8] sm:$0xff] %v248
    // Predicated region
    $region34: #{tpu_custom_call.1} parent=1 // pred_check
      _
    $region35: #{tpu_custom_call.1} parent=1 // pred_check_branch
      %251 = sbr.rel (0) target = $region37
    $region36: #{tpu_custom_call.1} parent=1 // pred_region
      %s253 = ssub.s32 128, 128
      %254 = vsyncadd [#allocation4], %s253
      %s256 = sshll.u32 [#allocation8], 4
      %s257 = int_to_ptr.vmem [resolvable:$true] %s256
      %259 = dma.vmem_to_hbm [thread:$0]  %s257, 128, %s5, [#allocation4]
    $region37: #{tpu_custom_call.1} parent=1 // pred_fallthru
      _
    // Predicated region
    $region38: #{tpu_custom_call.1} parent=1 // pred_check
      _
    $region39: #{tpu_custom_call.1} parent=1 // pred_check_branch
      %261 = sbr.rel (0) target = $region41
    $region40: #{tpu_custom_call.1} parent=1 // pred_region
      %262 = dma.done [#allocation4], 128
    $region41: #{tpu_custom_call.1} parent=1 // pred_fallthru
      _
    %263 = vsyncpa [#allocation3], 1
    %264 = vsyncpa [#allocation6], 1
    %265 = vsyncpa [#allocation4], 1

</llo_original>
